<compile_context>
chip_gen: v7x
topology: tpu7x:2x2x1
jax: 0.10.0
libtpu: 0.0.40
codegen_flags: <defaults>
</compile_context>

<pallas_src>
import jax
import jax.numpy as jnp
from jax.experimental import pallas as pl
from jax.experimental.pallas import tpu as pltpu

IN_FEATURES = 20
HIDDEN = 256
OUT_FEATURES = 10
N_PAD = 128   # padded output dim -> lane-dense, unmasked stores


def mlp_kernel(x_ref, w1_ref, b1_ref, w2_ref, b2_ref, o_ref):
    # x tile arrives as f32; cast to bf16 on the VPU (huge slack there), MXU matmul
    # with f32 accumulation, bias + ReLU in f32, second matmul in bf16, bf16 store.
    x = x_ref[...].astype(jnp.bfloat16)                                   # (tb, 20)
    h = jnp.dot(x, w1_ref[...], preferred_element_type=jnp.float32)       # (tb, 256) f32
    h = jnp.maximum(h + b1_ref[...], 0.0)
    o = jnp.dot(h.astype(jnp.bfloat16), w2_ref[...],
                preferred_element_type=jnp.float32)                       # (tb, 128) f32
    o_ref[...] = (o + b2_ref[...]).astype(o_ref.dtype)                    # bf16 store


def prepare_params(w1, b1, w2, b2):
    """One-time parameter prep (outside the hot path).

    w1: (20, 256), b1: (1, 256), w2: (256, 10), b2: (1, 10) -- float32, stored as
    (in_features, out_features), i.e. transpose of PyTorch's weight layout.
    """
    w1_bf = w1.astype(jnp.bfloat16)                                        # (20, 256)
    w2_p = (jnp.zeros((HIDDEN, N_PAD), jnp.float32)
            .at[:, :OUT_FEATURES].set(w2).astype(jnp.bfloat16))            # (256, 128)
    b2_p = jnp.zeros((1, N_PAD), jnp.float32).at[:, :OUT_FEATURES].set(b2)  # (1, 128)
    return w1_bf, b1.astype(jnp.float32), w2_p, b2_p


def _round16(n):
    return max(16, ((n + 15) // 16) * 16)


def mlp_forward(x, w1_p, b1_p, w2_p, b2_p, tile_b=2048):
    """x: (B, 20) float32. Returns (B, 10) float32."""
    B = x.shape[0]

    # Batch tile: multiple of 16 (bf16 sublane packing), large enough to amortize
    # per-step overhead, but capped so the grid keeps >= ~4 steps when B allows it
    # (megacore sharding on v7x + pipelining).
    tile_b = min(_round16(tile_b), _round16(pl.cdiv(B, 4)))
    n_blocks = pl.cdiv(B, tile_b)

    out_padded = pl.pallas_call(
        mlp_kernel,
        out_shape=jax.ShapeDtypeStruct((B, N_PAD), jnp.bfloat16),
        grid_spec=pltpu.PrefetchScalarGridSpec(
            num_scalar_prefetch=0,
            grid=(n_blocks,),
            in_specs=[
                pl.BlockSpec((tile_b, IN_FEATURES), lambda i: (i, 0)),   # x tile
                pl.BlockSpec((IN_FEATURES, HIDDEN), lambda i: (0, 0)),   # W1 (resident)
                pl.BlockSpec((1, HIDDEN), lambda i: (0, 0)),             # b1 (resident)
                pl.BlockSpec((HIDDEN, N_PAD), lambda i: (0, 0)),         # W2 (resident)
                pl.BlockSpec((1, N_PAD), lambda i: (0, 0)),              # b2 (resident)
            ],
            out_specs=pl.BlockSpec((tile_b, N_PAD), lambda i: (i, 0)),
        ),
        compiler_params=pltpu.CompilerParams(
            dimension_semantics=("parallel",),
            vmem_limit_bytes=32 * 1024 * 1024,   # big tiles also fit on v5e's scoped VMEM
        ),
    )(x, w1_p, b1_p, w2_p, b2_p)

    return out_padded[:, :OUT_FEATURES].astype(jnp.float32)


def init_params(key):
    # Mimics nn.Linear's uniform(-1/sqrt(in), 1/sqrt(in)) init, stored transposed.
    k1, k2, k3, k4 = jax.random.split(key, 4)
    bound1 = 1.0 / jnp.sqrt(IN_FEATURES)
    bound2 = 1.0 / jnp.sqrt(HIDDEN)
    w1 = jax.random.uniform(k1, (IN_FEATURES, HIDDEN), jnp.float32, -bound1, bound1)
    b1 = jax.random.uniform(k2, (1, HIDDEN), jnp.float32, -bound1, bound1)
    w2 = jax.random.uniform(k3, (HIDDEN, OUT_FEATURES), jnp.float32, -bound2, bound2)
    b2 = jax.random.uniform(k4, (1, OUT_FEATURES), jnp.float32, -bound2, bound2)
    return w1, b1, w2, b2


def reference(x, w1, b1, w2, b2):
    # Pure-JAX f32 reference of the PyTorch module's forward pass.
    return jnp.maximum(x @ w1 + b1, 0.0) @ w2 + b2


if __name__ == "__main__":
    key = jax.random.PRNGKey(0)
    kx1, kx2, kp = jax.random.split(key, 3)

    w1, b1, w2, b2 = init_params(kp)
    w1_p, b1_p, w2_p, b2_p = prepare_params(w1, b1, w2, b2)

    # Small batch (single grid step, partially filled boundary block).
    B1 = 8
    x1 = jax.random.normal(kx1, (B1, IN_FEATURES), jnp.float32)
    out1 = jax.block_until_ready(mlp_forward(x1, w1_p, b1_p, w2_p, b2_p))
    ref1 = reference(x1, w1, b1, w2, b2)
    assert out1.shape == (B1, OUT_FEATURES)
    assert jnp.allclose(out1, ref1, atol=5e-2, rtol=5e-2), "small-batch mismatch"

    # Ragged batch: exercises the multi-step grid + masked boundary store path.
    B2 = 200
    x2 = jax.random.normal(kx2, (B2, IN_FEATURES), jnp.float32)
    out2 = jax.block_until_ready(mlp_forward(x2, w1_p, b1_p, w2_p, b2_p))
    ref2 = reference(x2, w1, b1, w2, b2)
    assert out2.shape == (B2, OUT_FEATURES)
    assert jnp.allclose(out2, ref2, atol=5e-2, rtol=5e-2), "ragged-batch mismatch"

    print("KERNEL_OK")
</pallas_src>

<mosaic_0001>
module attributes {stable_mosaic.version = 11 : i64} {
  func.func @mlp_kernel(%arg0: i32, %arg1: memref<16x20xf32, #tpu.memory_space<vmem>>, %arg2: memref<20x256xbf16, #tpu.memory_space<vmem>>, %arg3: memref<1x256xf32, #tpu.memory_space<vmem>>, %arg4: memref<256x128xbf16, #tpu.memory_space<vmem>>, %arg5: memref<1x128xf32, #tpu.memory_space<vmem>>, %arg6: memref<16x128xbf16, #tpu.memory_space<vmem>>) attributes {dimension_semantics = [#tpu.dimension_semantics<parallel>], iteration_bounds = array<i64: 1>, scalar_prefetch = 0 : i64, scratch_operands = 0 : i64, tpu.core_type = #tpu.core_type<tc>, window_params = [{transform_indices = @transform_0, window_bounds = array<i64: 16, 20>}, {pipeline_mode = #tpu.pipeline_mode<synchronous>, transform_indices = @transform_1, window_bounds = array<i64: 20, 256>}, {pipeline_mode = #tpu.pipeline_mode<synchronous>, transform_indices = @transform_2, window_bounds = array<i64: 1, 256>}, {pipeline_mode = #tpu.pipeline_mode<synchronous>, transform_indices = @transform_3, window_bounds = array<i64: 256, 128>}, {pipeline_mode = #tpu.pipeline_mode<synchronous>, transform_indices = @transform_4, window_bounds = array<i64: 1, 128>}, {transform_indices = @transform_5, window_bounds = array<i64: 16, 128>}]} {
    %c0 = arith.constant 0 : index
    %c0_0 = arith.constant 0 : index
    %0 = vector.load %arg1[%c0, %c0_0] : memref<16x20xf32, #tpu.memory_space<vmem>>, vector<16x20xf32>
    %1 = arith.truncf %0 : vector<16x20xf32> to vector<16x20xbf16>
    %c0_1 = arith.constant 0 : index
    %c0_2 = arith.constant 0 : index
    %2 = vector.load %arg2[%c0_1, %c0_2] : memref<20x256xbf16, #tpu.memory_space<vmem>>, vector<20x256xbf16>
    %cst = arith.constant dense<0.000000e+00> : vector<16x256xf32>
    %3 = tpu.matmul %1, %2, %cst {dimension_numbers = #tpu.dot_dimension_numbers<[1], [0], [0], [1], [0, 0, 1, 1], [], []>} : vector<16x20xbf16>, vector<20x256xbf16>, vector<16x256xf32> -> vector<16x256xf32>
    %c0_3 = arith.constant 0 : index
    %c0_4 = arith.constant 0 : index
    %4 = vector.load %arg3[%c0_3, %c0_4] : memref<1x256xf32, #tpu.memory_space<vmem>>, vector<1x256xf32>
    %5 = vector.broadcast %4 : vector<1x256xf32> to vector<16x256xf32>
    %6 = arith.addf %3, %5 : vector<16x256xf32>
    %cst_5 = arith.constant 0.000000e+00 : f32
    %7 = vector.broadcast %cst_5 : f32 to vector<16x256xf32>
    %8 = arith.maximumf %6, %7 : vector<16x256xf32>
    %9 = arith.truncf %8 : vector<16x256xf32> to vector<16x256xbf16>
    %c0_6 = arith.constant 0 : index
    %c0_7 = arith.constant 0 : index
    %10 = vector.load %arg4[%c0_6, %c0_7] : memref<256x128xbf16, #tpu.memory_space<vmem>>, vector<256x128xbf16>
    %cst_8 = arith.constant dense<0.000000e+00> : vector<16x128xf32>
    %11 = tpu.matmul %9, %10, %cst_8 {dimension_numbers = #tpu.dot_dimension_numbers<[1], [0], [0], [1], [0, 0, 1, 1], [], []>} : vector<16x256xbf16>, vector<256x128xbf16>, vector<16x128xf32> -> vector<16x128xf32>
    %c0_9 = arith.constant 0 : index
    %c0_10 = arith.constant 0 : index
    %12 = vector.load %arg5[%c0_9, %c0_10] : memref<1x128xf32, #tpu.memory_space<vmem>>, vector<1x128xf32>
    %13 = vector.broadcast %12 : vector<1x128xf32> to vector<16x128xf32>
    %14 = arith.addf %11, %13 : vector<16x128xf32>
    %15 = arith.truncf %14 : vector<16x128xf32> to vector<16x128xbf16>
    %c0_11 = arith.constant 0 : index
    %c0_12 = arith.constant 0 : index
    %16 = vector.load %arg6[%c0_11, %c0_12] : memref<16x128xbf16, #tpu.memory_space<vmem>>, vector<16x128xbf16>
    tpu.vector_store %arg6[%c0_11, %c0_12], %15 {strides = array<i32>} : memref<16x128xbf16, #tpu.memory_space<vmem>>, vector<16x128xbf16>,
    return
  }
  func.func @transform_0(%arg0: i32) -> (i32, i32) {
    %c0_i32 = arith.constant 0 : i32
    %c0_i32_0 = arith.constant 0 : i32
    return %arg0, %c0_i32 : i32, i32
  }
  func.func @transform_1(%arg0: i32) -> (i32, i32) {
    %c0_i32 = arith.constant 0 : i32
    %c0_i32_0 = arith.constant 0 : i32
    %c0_i32_1 = arith.constant 0 : i32
    return %c0_i32, %c0_i32_0 : i32, i32
  }
  func.func @transform_2(%arg0: i32) -> (i32, i32) {
    %c0_i32 = arith.constant 0 : i32
    %c0_i32_0 = arith.constant 0 : i32
    %c0_i32_1 = arith.constant 0 : i32
    return %c0_i32, %c0_i32_0 : i32, i32
  }
  func.func @transform_3(%arg0: i32) -> (i32, i32) {
    %c0_i32 = arith.constant 0 : i32
    %c0_i32_0 = arith.constant 0 : i32
    %c0_i32_1 = arith.constant 0 : i32
    return %c0_i32, %c0_i32_0 : i32, i32
  }
  func.func @transform_4(%arg0: i32) -> (i32, i32) {
    %c0_i32 = arith.constant 0 : i32
    %c0_i32_0 = arith.constant 0 : i32
    %c0_i32_1 = arith.constant 0 : i32
    return %c0_i32, %c0_i32_0 : i32, i32
  }
  func.func @transform_5(%arg0: i32) -> (i32, i32) {
    %c0_i32 = arith.constant 0 : i32
    %c0_i32_0 = arith.constant 0 : i32
    return %arg0, %c0_i32 : i32, i32
  }
}

</mosaic_0001>

<llo_original>
// kernel: tpu_custom_call.1
$region0: #{tpu_custom_call.1}
  #allocation0 [shape = 'u32[]', space=smem, size = 0x4, offset = 0x4, fixed_abs, tag = 'smem constant byte address 0x4 - core index']
  #allocation1 [shape = 'u32[144,128]{1,0:T(1,128)}', space=vmem, size = 0x12000, scoped, tag = 'internal scratch']
  %s0 = inlined_call_operand.hbm [shape: f32[8,20], index: 0, kind: input, shape index: {}]
  %s1 = inlined_call_operand.hbm [shape: bf16[20,256], index: 1, kind: input, shape index: {}]
  %s2 = inlined_call_operand.vmem [shape: f32[1,256], index: 2, kind: input, shape index: {}]
  %s3 = inlined_call_operand.hbm [shape: bf16[256,128], index: 3, kind: input, shape index: {}]
  %s4 = inlined_call_operand.vmem [shape: f32[1,128], index: 4, kind: input, shape index: {}]
  %s5 = inlined_call_operand.hbm [shape: bf16[8,128], index: 5, kind: output, shape index: {}]
  %s6 = sld [smem:[#allocation0]]
  $region42: #{tpu_custom_call.1} parent=0
    _
  %s8 = ssub.s32 1, %s6
  %s9 = scalar_select 0, %s8, %s6
  $region1: #{tpu_custom_call.1} parent=0
    #allocation2 [shape = 'u8[8192]{0}', space=vmem, size = 0x2000, scoped, tag = 'input window, operand 0, single buffered']
    #allocation3 [shape = 's32[1]{0}', space=sflag, size = 0x4, scoped, tag = 'scoped memory for tpu_custom_call.1']
    #allocation4 [shape = 's32[1]{0}', space=sflag, size = 0x4, scoped, tag = 'scoped memory for tpu_custom_call.1']
    #allocation5 [shape = 'u8[12288]{0}', space=vmem, size = 0x3000, scoped, tag = 'input window, operand 1, single buffered']
    #allocation6 [shape = 's32[1]{0}', space=sflag, size = 0x4, scoped, tag = 'scoped memory for tpu_custom_call.1']
    #allocation7 [shape = 'u8[65536]{0}', space=vmem, size = 0x10000, scoped, tag = 'input window, operand 3, single buffered']
    #allocation8 [shape = 'u8[4096]{0}', space=vmem, size = 0x1000, scoped, tag = 'output window, operand 0, single buffered']
    %10 = vsyncpa [#allocation3], 0
    %11 = vsyncpa [#allocation6], 0
    %12 = vsyncpa [#allocation4], 0
    // Predicated region
    $region2: #{tpu_custom_call.1} parent=1 // pred_check
      _
    $region3: #{tpu_custom_call.1} parent=1 // pred_check_branch
      %14 = sbr.rel (0) target = $region5
    $region4: #{tpu_custom_call.1} parent=1 // pred_region
      %s16 = ssub.s32 256, 128
      %17 = vsyncadd [#allocation3], %s16
      %s18 = sshll.u32 [#allocation2], 4
      %s19 = int_to_ptr.vmem [resolvable:$true] %s18
      %24 = dma.hbm_to_vmem [thread:$0]  %s0, 128, %s19, [#allocation3], 128, 128, 8
    $region5: #{tpu_custom_call.1} parent=1 // pred_fallthru
      _
    // Predicated region
    $region6: #{tpu_custom_call.1} parent=1 // pred_check
      _
    $region7: #{tpu_custom_call.1} parent=1 // pred_check_branch
      %26 = sbr.rel (0) target = $region9
    $region8: #{tpu_custom_call.1} parent=1 // pred_region
      %s28 = ssub.s32 384, 384
      %29 = vsyncadd [#allocation6], %s28
      %s30 = sshll.u32 [#allocation5], 4
      %s31 = int_to_ptr.vmem [resolvable:$true] %s30
      %36 = dma.hbm_to_vmem [thread:$0]  %s1, 384, %s31, [#allocation6], 128, 128, 8
    $region9: #{tpu_custom_call.1} parent=1 // pred_fallthru
      _
    // Predicated region
    $region10: #{tpu_custom_call.1} parent=1 // pred_check
      _
    $region11: #{tpu_custom_call.1} parent=1 // pred_check_branch
      %38 = sbr.rel (0) target = $region13
    $region12: #{tpu_custom_call.1} parent=1 // pred_region
      _
    $region13: #{tpu_custom_call.1} parent=1 // pred_fallthru
      _
    // Predicated region
    $region14: #{tpu_custom_call.1} parent=1 // pred_check
      _
    $region15: #{tpu_custom_call.1} parent=1 // pred_check_branch
      %40 = sbr.rel (0) target = $region17
    $region16: #{tpu_custom_call.1} parent=1 // pred_region
      %s42 = ssub.s32 2048, 2048
      %43 = vsyncadd [#allocation6], %s42
      %s44 = sshll.u32 [#allocation7], 4
      %s45 = int_to_ptr.vmem [resolvable:$true] %s44
      %50 = dma.hbm_to_vmem [thread:$0]  %s3, 2048, %s45, [#allocation6], 64, 64, 4
    $region17: #{tpu_custom_call.1} parent=1 // pred_fallthru
      _
    // Predicated region
    $region18: #{tpu_custom_call.1} parent=1 // pred_check
      _
    $region19: #{tpu_custom_call.1} parent=1 // pred_check_branch
      %52 = sbr.rel (0) target = $region21
    $region20: #{tpu_custom_call.1} parent=1 // pred_region
      _
    $region21: #{tpu_custom_call.1} parent=1 // pred_fallthru
      _
    // Predicated region
    $region22: #{tpu_custom_call.1} parent=1 // pred_check
      _
    $region23: #{tpu_custom_call.1} parent=1 // pred_check_branch
      %54 = sbr.rel (0) target = $region25
    $region24: #{tpu_custom_call.1} parent=1 // pred_region
      %55 = dma.done [#allocation3], 256
    $region25: #{tpu_custom_call.1} parent=1 // pred_fallthru
      _
    // Predicated region
    $region26: #{tpu_custom_call.1} parent=1 // pred_check
      _
    $region27: #{tpu_custom_call.1} parent=1 // pred_check_branch
      %57 = sbr.rel (0) target = $region29
    $region28: #{tpu_custom_call.1} parent=1 // pred_region
      %58 = dma.done [#allocation6], 384
    $region29: #{tpu_custom_call.1} parent=1 // pred_fallthru
      _
    // Predicated region
    $region30: #{tpu_custom_call.1} parent=1 // pred_check
      _
    $region31: #{tpu_custom_call.1} parent=1 // pred_check_branch
      %60 = sbr.rel (0) target = $region33
    $region32: #{tpu_custom_call.1} parent=1 // pred_region
      %61 = dma.done [#allocation6], 2048
    $region33: #{tpu_custom_call.1} parent=1 // pred_fallthru
      _
    %v63 = vld [vmem:[#allocation2] sm:$0xff]
    %v64 = vld [vmem:[#allocation2 + $0x8] sm:$0xff]
    %v65 = vpack.c.bf16 %v64, %v63
    %v66 = vld [vmem:[#allocation5] sm:$0xff]
    %v67 = vld [vmem:[#allocation5 + $0x8] sm:$0xff]
    %v68 = vld [vmem:[#allocation5 + $0x10] sm:$0x33]
    %v69 = vld [vmem:[%s2] sm:$0x3]
    %v71 = vlaneseq
    %v72 = vshrl.u32 %v71, 7
    %v73 = vsub.s32 0, %v72
    %v74 = vrot.slane %v69, %v73
    %v75 = vlaneseq
    %v76 = vshrl.u32 %v75, 7
    %v77 = vsub.s32 1, %v76
    %v78 = vrot.slane %v69, %v77
    %v84 = vunpack.c.l.b16 %v66
    %v85 = vunpack.c.h.b16 %v66
    %v86 = vunpack.c.l.b16 %v67
    %v87 = vunpack.c.h.b16 %v67
    %v88 = vunpack.c.l.b16 %v68
    %v89 = vunpack.c.h.b16 %v68
    %v90 = vpack.c.b16 %v86, %v84
    %v91 = vpack.c.b16 %v87, %v85
    %v92 = vpack.c.b16 %v88, %v88
    %v93 = vpack.c.b16 %v89, %v89
    %vm96 = vcmask 162816
    %v98 = vsel %vm96, %v65, 0
    %vm100 = vcmask 1041408
    %v102 = vsel %vm100, %v92, 0
    %v105 = vsel %vm100, %v93, 0
    %107 = vmatprep.subr.bf16.mxu0 %v91
    %108 = vmatpush1.bf16.msra.mxu0 %v90
    %109 = vmatprep.subr.bf16.mxu0 %v105
    %110 = vmatpush1.bf16.msra.mxu0 %v102
    %111 = vmatprep.subr.bf16.mxu0 0
    %112 = vmatpush1.bf16.msra.mxu0 0
    %113 = vmatprep.subr.bf16.mxu0 0
    %114 = vmatpush1.bf16.msra.mxu0 0
    %115 = vmatprep.subr.bf16.mxu0 0
    %116 = vmatpush1.bf16.msra.mxu0 0
    %117 = vmatprep.subr.bf16.mxu0 0
    %118 = vmatpush1.bf16.msra.mxu0 0
    %119 = vmatprep.subr.bf16.mxu0 0
    %120 = vmatpush1.bf16.msra.mxu0 0
    %121 = vmatprep.subr.bf16.mxu0 0
    %122 = vmatpush1.bf16.msra.mxu0 0
    %123 = vmatprep.subr.bf16.mxu0 0
    %124 = vmatpush1.bf16.msra.mxu0 0
    %125 = vmatprep.subr.bf16.mxu0 0
    %126 = vmatpush1.bf16.msra.mxu0 0
    %127 = vmatprep.subr.bf16.mxu0 0
    %128 = vmatpush1.bf16.msra.mxu0 0
    %129 = vmatprep.subr.bf16.mxu0 0
    %130 = vmatpush1.bf16.msra.mxu0 0
    %131 = vmatprep.subr.bf16.mxu0 0
    %132 = vmatpush1.bf16.msra.mxu0 0
    %133 = vmatprep.subr.bf16.mxu0 0
    %134 = vmatpush1.bf16.msra.mxu0 0
    %135 = vmatprep.subr.bf16.mxu0 0
    %136 = vmatpush1.bf16.msra.mxu0 0
    %137 = vmatprep.subr.bf16.mxu0 0
    %138 = vmatpush1.bf16.msra.mxu0 0
    %139 = vmatprep.mubr.bf16.mxu0 0
    %140 = vmatmul.mubr.bf16.gmra.mrb[0].mxu0 %v98
    %v141 = vpop.f32.mrb[0].mxu0
    %v142 = vadd.f32 %v74, %v141
    %v143 = vpop.f32.mrb[0].mxu0
    %v144 = vadd.f32 %v78, %v143
    %v145 = vpop.f32.mrb[0].mxu0
    %v146 = vadd.f32 %v74, %v145
    %v147 = vpop.f32.mrb[0].mxu0
    %v148 = vadd.f32 %v78, %v147
    %149 = vdwg.mxu0
    %v150 = vmax.f32 %v142, 0.0
    %v151 = vmax.f32 %v144, 0.0
    %v152 = vmax.f32 %v146, 0.0
    %v153 = vmax.f32 %v148, 0.0
    %v154 = vpack.c.bf16 %v152, %v150
    %v155 = vpack.c.bf16 %v153, %v151
    %v156 = vld [vmem:[#allocation7] sm:$0xf]
    %v157 = vld [vmem:[#allocation7 + $0x4] sm:$0xf]
    %v158 = vld [vmem:[#allocation7 + $0x8] sm:$0xf]
    %v159 = vld [vmem:[#allocation7 + $0xc] sm:$0xf]
    %v160 = vld [vmem:[#allocation7 + $0x10] sm:$0xf]
    %v161 = vld [vmem:[#allocation7 + $0x14] sm:$0xf]
    %v162 = vld [vmem:[#allocation7 + $0x18] sm:$0xf]
    %v163 = vld [vmem:[#allocation7 + $0x1c] sm:$0xf]
    %v164 = vld [vmem:[#allocation7 + $0x20] sm:$0xf]
    %v165 = vld [vmem:[#allocation7 + $0x24] sm:$0xf]
    %v166 = vld [vmem:[#allocation7 + $0x28] sm:$0xf]
    %v167 = vld [vmem:[#allocation7 + $0x2c] sm:$0xf]
    %v168 = vld [vmem:[#allocation7 + $0x30] sm:$0xf]
    %v169 = vld [vmem:[#allocation7 + $0x34] sm:$0xf]
    %v170 = vld [vmem:[#allocation7 + $0x38] sm:$0xf]
    %v171 = vld [vmem:[#allocation7 + $0x3c] sm:$0xf]
    %v172 = vld [vmem:[#allocation7 + $0x40] sm:$0xf]
    %v173 = vld [vmem:[#allocation7 + $0x44] sm:$0xf]
    %v174 = vld [vmem:[#allocation7 + $0x48] sm:$0xf]
    %v175 = vld [vmem:[#allocation7 + $0x4c] sm:$0xf]
    %v176 = vld [vmem:[#allocation7 + $0x50] sm:$0xf]
    %v177 = vld [vmem:[#allocation7 + $0x54] sm:$0xf]
    %v178 = vld [vmem:[#allocation7 + $0x58] sm:$0xf]
    %v179 = vld [vmem:[#allocation7 + $0x5c] sm:$0xf]
    %v180 = vld [vmem:[#allocation7 + $0x60] sm:$0xf]
    %v181 = vld [vmem:[#allocation7 + $0x64] sm:$0xf]
    %v182 = vld [vmem:[#allocation7 + $0x68] sm:$0xf]
    %v183 = vld [vmem:[#allocation7 + $0x6c] sm:$0xf]
    %v184 = vld [vmem:[#allocation7 + $0x70] sm:$0xf]
    %v185 = vld [vmem:[#allocation7 + $0x74] sm:$0xf]
    %v186 = vld [vmem:[#allocation7 + $0x78] sm:$0xf]
    %v187 = vld [vmem:[#allocation7 + $0x7c] sm:$0xf]
    %v188 = vld [vmem:[%s4] sm:$0x1]
    %v190 = vlaneseq
    %v191 = vshrl.u32 %v190, 7
    %v192 = vsub.s32 0, %v191
    %v193 = vrot.slane %v188, %v192
    %v227 = vunpack.c.l.b16 %v156
    %v228 = vunpack.c.l.b16 %v157
    %v229 = vunpack.c.l.b16 %v158
    %v230 = vunpack.c.l.b16 %v159
    %v231 = vunpack.c.l.b16 %v160
    %v232 = vunpack.c.l.b16 %v161
    %v233 = vunpack.c.l.b16 %v162
    %v234 = vunpack.c.l.b16 %v163
    %v235 = vunpack.c.l.b16 %v164
    %v236 = vunpack.c.l.b16 %v165
    %v237 = vunpack.c.l.b16 %v166
    %v238 = vunpack.c.l.b16 %v167
    %v239 = vunpack.c.l.b16 %v168
    %v240 = vunpack.c.l.b16 %v169
    %v241 = vunpack.c.l.b16 %v170
    %v242 = vunpack.c.l.b16 %v171
    %v243 = vunpack.c.l.b16 %v172
    %v244 = vunpack.c.l.b16 %v173
    %v245 = vunpack.c.l.b16 %v174
    %v246 = vunpack.c.l.b16 %v175
    %v247 = vunpack.c.l.b16 %v176
    %v248 = vunpack.c.l.b16 %v177
    %v249 = vunpack.c.l.b16 %v178
    %v250 = vunpack.c.l.b16 %v179
    %v251 = vunpack.c.l.b16 %v180
    %v252 = vunpack.c.l.b16 %v181
    %v253 = vunpack.c.l.b16 %v182
    %v254 = vunpack.c.l.b16 %v183
    %v255 = vunpack.c.l.b16 %v184
    %v256 = vunpack.c.l.b16 %v185
    %v257 = vunpack.c.l.b16 %v186
    %v258 = vunpack.c.l.b16 %v187
    %v259 = vpack.c.b16 %v228, %v227
    %v260 = vpack.c.b16 %v230, %v229
    %v261 = vpack.c.b16 %v232, %v231
    %v262 = vpack.c.b16 %v234, %v233
    %v263 = vpack.c.b16 %v236, %v235
    %v264 = vpack.c.b16 %v238, %v237
    %v265 = vpack.c.b16 %v240, %v239
    %v266 = vpack.c.b16 %v242, %v241
    %v267 = vpack.c.b16 %v244, %v243
    %v268 = vpack.c.b16 %v246, %v245
    %v269 = vpack.c.b16 %v248, %v247
    %v270 = vpack.c.b16 %v250, %v249
    %v271 = vpack.c.b16 %v252, %v251
    %v272 = vpack.c.b16 %v254, %v253
    %v273 = vpack.c.b16 %v256, %v255
    %v274 = vpack.c.b16 %v258, %v257
    %291 = vmatprep.subr.bf16.mxu0 0
    %292 = vmatpush1.bf16.msra.mxu0 %v259
    %293 = vmatprep.subr.bf16.mxu0 0
    %294 = vmatpush1.bf16.msra.mxu0 %v260
    %295 = vmatprep.subr.bf16.mxu0 0
    %296 = vmatpush1.bf16.msra.mxu0 %v261
    %297 = vmatprep.subr.bf16.mxu0 0
    %298 = vmatpush1.bf16.msra.mxu0 %v262
    %299 = vmatprep.subr.bf16.mxu0 0
    %300 = vmatpush1.bf16.msra.mxu0 %v263
    %301 = vmatprep.subr.bf16.mxu0 0
    %302 = vmatpush1.bf16.msra.mxu0 %v264
    %303 = vmatprep.subr.bf16.mxu0 0
    %304 = vmatpush1.bf16.msra.mxu0 %v265
    %305 = vmatprep.subr.bf16.mxu0 0
    %306 = vmatpush1.bf16.msra.mxu0 %v266
    %307 = vmatprep.subr.bf16.mxu0 0
    %308 = vmatpush1.bf16.msra.mxu0 %v267
    %309 = vmatprep.subr.bf16.mxu0 0
    %310 = vmatpush1.bf16.msra.mxu0 %v268
    %311 = vmatprep.subr.bf16.mxu0 0
    %312 = vmatpush1.bf16.msra.mxu0 %v269
    %313 = vmatprep.subr.bf16.mxu0 0
    %314 = vmatpush1.bf16.msra.mxu0 %v270
    %315 = vmatprep.subr.bf16.mxu0 0
    %316 = vmatpush1.bf16.msra.mxu0 %v271
    %317 = vmatprep.subr.bf16.mxu0 0
    %318 = vmatpush1.bf16.msra.mxu0 %v272
    %319 = vmatprep.subr.bf16.mxu0 0
    %320 = vmatpush1.bf16.msra.mxu0 %v273
    %321 = vmatprep.subr.bf16.mxu0 0
    %322 = vmatpush1.bf16.msra.mxu0 %v274
    %323 = vmatprep.mubr.bf16.mxu0 %v155
    %324 = vmatmul.mubr.bf16.gmra.mrb[0].mxu0 %v154
    %v325 = vpop.f32.mrb[0].mxu0
    %v326 = vadd.f32 %v193, %v325
    %v327 = vpop.f32.mrb[0].mxu0
    %v328 = vpop.f32.mrb[0].mxu0
    %v329 = vadd.f32 %v193, %v328
    %v330 = vpop.f32.mrb[0].mxu0
    %331 = vdwg.mxu0
    %v332 = vpack.c.bf16 %v329, %v326
    %v334 = vunpack.c.l.b16 %v332
    %v335 = vunpack.c.h.b16 %v332
    %v336 = vpack.c.b16 %v334, %v334
    %v337 = vpack.c.b16 %v335, %v335
    %340 = vst [vmem:[#allocation8] sm:$0xf] %v336
    %341 = vst [vmem:[#allocation8 + $0x4] sm:$0xf] %v337
    // Predicated region
    $region34: #{tpu_custom_call.1} parent=1 // pred_check
      _
    $region35: #{tpu_custom_call.1} parent=1 // pred_check_branch
      %343 = sbr.rel (0) target = $region37
    $region36: #{tpu_custom_call.1} parent=1 // pred_region
      %s345 = ssub.s32 128, 64
      %346 = vsyncadd [#allocation4], %s345
      %s347 = sshll.u32 [#allocation8], 4
      %s348 = int_to_ptr.vmem [resolvable:$true] %s347
      %353 = dma.vmem_to_hbm [thread:$0]  %s348, 64, %s5, [#allocation4], 64, 64, 4
    $region37: #{tpu_custom_call.1} parent=1 // pred_fallthru
      _
    // Predicated region
    $region38: #{tpu_custom_call.1} parent=1 // pred_check
      _
    $region39: #{tpu_custom_call.1} parent=1 // pred_check_branch
      %355 = sbr.rel (0) target = $region41
    $region40: #{tpu_custom_call.1} parent=1 // pred_region
      %356 = dma.done [#allocation4], 128
    $region41: #{tpu_custom_call.1} parent=1 // pred_fallthru
      _
    %357 = vsyncpa [#allocation3], 1
    %358 = vsyncpa [#allocation6], 1
    %359 = vsyncpa [#allocation4], 1

</llo_original>
